<compile_context>
chip_gen: v6e
topology: v6e:2x2x1
jax: 0.10.0
libtpu: 0.0.40
codegen_flags: <defaults>
</compile_context>

<pallas_src>
import jax
import jax.numpy as jnp
from jax import lax
from jax.experimental import pallas as pl
from jax.experimental.pallas import tpu as pltpu


def _round_up(x, m):
    return (x + m - 1) // m * m


def _pad2d(a, rows, cols):
    out = jnp.zeros((rows, cols), a.dtype)
    return out.at[:a.shape[0], :a.shape[1]].set(a)


# ----------------------------- Pallas kernel ------------------------------- #
def mgnn_forward_kernel(click_ref, buy_ref, idx_ref,      # [tb,L] [tb,L] [tb,K1]
                        h2_ref,                           # [Np, Hp] bf16
                        nembT_ref,                        # [Hp, Np] bf16
                        wgc_ref, wgb_ref,                 # [1, Hp] f32
                        w_ref,                            # [Hp, Hp] bf16
                        y_ref):                           # [tb, K1p] f32 (out)
    tb, L = click_ref.shape
    Np, Hp = h2_ref.shape
    K1 = idx_ref.shape[1]
    K1p = y_ref.shape[1]

    lane_ids = lax.broadcasted_iota(jnp.int32, (tb, Np), 1)

    # ---- fused click/buy masked gather weights (interleaved L-loop) ----
    click_seq = click_ref[...]
    buy_seq = buy_ref[...]
    gw_c = jnp.zeros((tb, Np), jnp.float32)
    gw_b = jnp.zeros((tb, Np), jnp.float32)
    for l in range(L):            # L small & static; two independent VALU chains
        cc = click_seq[:, l:l + 1]
        bc = buy_seq[:, l:l + 1]
        gw_c = gw_c + jnp.logical_and(cc == lane_ids, cc != 0).astype(jnp.float32)
        gw_b = gw_b + jnp.logical_and(bc == lane_ids, bc != 0).astype(jnp.float32)

    # One MXU matmul for both paths (counts are exact in bf16).
    gw = jnp.concatenate([gw_c, gw_b], axis=0)                   # [2tb, Np]
    emb2 = jnp.dot(gw.astype(h2_ref.dtype), h2_ref[...],
                   preferred_element_type=jnp.float32)           # [2tb, Hp]

    tot_c = (click_seq != 0).astype(jnp.float32).sum(axis=1, keepdims=True)
    tot_b = (buy_seq != 0).astype(jnp.float32).sum(axis=1, keepdims=True)
    # Exact division; the clamp keeps all-padding rows finite (the PyTorch
    # reference would produce NaN/Inf for such rows) -- documented divergence.
    click_emb = emb2[:tb] / jnp.maximum(tot_c, 1.0)              # [tb, Hp]
    buy_emb = emb2[tb:] / jnp.maximum(tot_b, 1.0)                # [tb, Hp]

    # ---- gate + blend (single fused logit reduce, exact sigmoid) ----
    logit = jnp.sum(click_emb * wgc_ref[...] + buy_emb * wgb_ref[...],
                    axis=1, keepdims=True)                       # [tb, 1]
    alpha = 1.0 / (1.0 + jnp.exp(-logit))
    o = alpha * click_emb + (1.0 - alpha) * buy_emb              # [tb, Hp] f32

    # ---- (o @ W) then one MXU scores matmul over every node ----
    ow = jnp.dot(o.astype(w_ref.dtype), w_ref[...],
                 preferred_element_type=jnp.float32)             # [tb, Hp]
    scores = jnp.dot(ow.astype(nembT_ref.dtype), nembT_ref[...],
                     preferred_element_type=jnp.float32)         # [tb, Np]

    # ---- select the K+1 candidate columns (lane compares + masked reduces) ----
    idx = idx_ref[...]                                           # [tb, K1] int32
    out_lane = lax.broadcasted_iota(jnp.int32, (tb, K1p), 1)
    y = jnp.zeros((tb, K1p), jnp.float32)
    for k in range(K1):                                          # K1 small & static
        sel = jnp.sum(jnp.where(lane_ids == idx[:, k:k + 1], scores, 0.0),
                      axis=1, keepdims=True)                     # [tb, 1]
        y = y + jnp.where(out_lane == k, sel, 0.0)
    y_ref[...] = y                                               # lane-dense store


# ------------------------------ glue / setup ------------------------------- #
def mean_aggregate(x, edge_index, num_nodes):
    """PyG MessagePassing(aggr='mean') with message(x_j)=x_j."""
    src, dst = edge_index[0], edge_index[1]
    summed = jnp.zeros((num_nodes, x.shape[1]), x.dtype).at[dst].add(x[src])
    counts = jnp.zeros((num_nodes,), x.dtype).at[dst].add(1.0)
    return jnp.where(counts[:, None] > 0,
                     summed / jnp.maximum(counts, 1.0)[:, None], 0.0)


def graph_conv(graphs, node_emb, num_nodes):
    h = mean_aggregate(node_emb, graphs[0], num_nodes)
    for g in graphs[1:]:
        h = h + mean_aggregate(node_emb, g, num_nodes)
    return h


def init_mgnn_params(key, graphs, hidden_num, node_num):
    k0, k1, k2 = jax.random.split(key, 3)
    node_embedding = jax.random.uniform(k0, (node_num, hidden_num),
                                        jnp.float32) / 100.0
    wg = jax.random.uniform(k1, (1, 2 * hidden_num), jnp.float32) / 1000.0
    w = jax.random.uniform(k2, (hidden_num, hidden_num), jnp.float32)
    h1 = node_embedding + graph_conv(graphs, node_embedding, node_num)
    h2 = h1 + graph_conv(graphs, h1, node_num)
    return dict(node_embedding=node_embedding, Wg=wg, W=w,
                node_h1_emb=h1, node_h2_emb=h2)


def mgnn_forward(buy_list, click_list, target, neg, params, *, batch_tile=512):
    node_idx = jnp.concatenate([neg, target], axis=1).astype(jnp.int32)
    B, K1 = node_idx.shape
    L = click_list.shape[1]
    N, H = params["node_h2_emb"].shape

    Hp = _round_up(H, 128)       # lane-dense MXU operands
    Np = _round_up(N, 128)       # lane-dense gather weights / scores
    K1p = _round_up(K1, 128)     # lane-dense output (sliced back below)

    # Pad batch to a sublane multiple so in-kernel sublane splits/concats are
    # tile-aligned.  Padded rows are all-zero and sliced away afterwards.
    Bp = _round_up(B, 8)
    # TODO(synk): for v7x choose tb <= Bp//2 when Bp allows so the 'parallel'
    # grid axis can shard across both TensorCores.
    tb = batch_tile if Bp % batch_tile == 0 else Bp

    def pad_batch(a):
        return jnp.zeros((Bp, a.shape[1]), a.dtype).at[:B].set(a)

    click_p = pad_batch(click_list.astype(jnp.int32))
    buy_p = pad_batch(buy_list.astype(jnp.int32))
    idx_p = pad_batch(node_idx)

    # bf16 MXU operands (f32 accumulation); element-wise math stays f32.
    h2_p = _pad2d(params["node_h2_emb"], Np, Hp).astype(jnp.bfloat16)
    nembT_p = _pad2d(params["node_embedding"], Np, Hp).astype(jnp.bfloat16).T   # [Hp, Np]
    w_p = _pad2d(params["W"], Hp, Hp).astype(jnp.bfloat16)
    wg = params["Wg"].astype(jnp.float32)
    wgc = _pad2d(wg[:, :H], 1, Hp)            # click half of Wg
    wgb = _pad2d(wg[:, H:], 1, Hp)            # buy half of Wg

    # VMEM budget: double-buffered blocks + in-kernel temporaries + headroom.
    block_bytes = 2 * (2 * tb * L * 4 + tb * K1 * 4
                       + Np * Hp * 2 + Hp * Np * 2 + Hp * Hp * 2
                       + 2 * Hp * 4 + tb * K1p * 4)
    temp_bytes = 4 * (5 * tb * Np + tb * K1p + 6 * tb * Hp)
    vmem_limit = max(block_bytes + temp_bytes + (4 << 20), 32 << 20)

    cost = pl.CostEstimate(
        flops=int(Bp * (4 * Np * Hp + 2 * Hp * Hp + 2 * Hp * Np)),
        transcendentals=int(Bp),
        bytes_accessed=int(2 * (2 * Np * Hp + Hp * Hp) + 2 * Hp * 4
                           + Bp * (2 * L * 4 + K1 * 4 + K1p * 4)))

    y_padded = pl.pallas_call(
        mgnn_forward_kernel,
        out_shape=jax.ShapeDtypeStruct((Bp, K1p), jnp.float32),
        grid_spec=pltpu.PrefetchScalarGridSpec(
            num_scalar_prefetch=0,
            grid=(Bp // tb,),
            in_specs=[
                pl.BlockSpec((tb, L), lambda i: (i, 0)),     # click
                pl.BlockSpec((tb, L), lambda i: (i, 0)),     # buy
                pl.BlockSpec((tb, K1), lambda i: (i, 0)),    # candidate idx
                pl.BlockSpec((Np, Hp), lambda i: (0, 0)),    # h2 (bf16)
                pl.BlockSpec((Hp, Np), lambda i: (0, 0)),    # node_emb^T (bf16)
                pl.BlockSpec((1, Hp), lambda i: (0, 0)),     # Wg click half
                pl.BlockSpec((1, Hp), lambda i: (0, 0)),     # Wg buy half
                pl.BlockSpec((Hp, Hp), lambda i: (0, 0)),    # W (bf16)
            ],
            out_specs=pl.BlockSpec((tb, K1p), lambda i: (i, 0)),
        ),
        compiler_params=pltpu.CompilerParams(
            dimension_semantics=("parallel",),
            vmem_limit_bytes=int(vmem_limit)),
        cost_estimate=cost,
    )(click_p, buy_p, idx_p, h2_p, nembT_p, wgc, wgb, w_p)

    y = y_padded[:B, :K1]
    K = neg.shape[1]
    label = jnp.broadcast_to(
        jnp.concatenate([jnp.zeros((K,), jnp.int32),
                         jnp.ones((1,), jnp.int32)]), (B, K1))
    return y, label


def mgnn_forward_ref(buy_list, click_list, target, neg, params):
    """Pure-JAX f32 reference mirroring the PyTorch forward."""
    node_idx = jnp.concatenate([neg, target], axis=1)

    def embedding(seq):
        mark = (seq != 0).astype(jnp.float32)
        h2_emb = params["node_h2_emb"][seq]
        emb = (h2_emb * mark[:, :, None]).sum(axis=1)
        return emb / mark.sum(axis=1, keepdims=True)

    click_emb = embedding(click_list)
    buy_emb = embedding(buy_list)
    node_emb = params["node_embedding"][node_idx]                 # [B, K1, H]
    cat = jnp.concatenate([click_emb, buy_emb], axis=1)
    alpha = jax.nn.sigmoid(params["Wg"] @ cat.T)[0]               # [B]
    o = alpha[:, None] * click_emb + (1.0 - alpha)[:, None] * buy_emb
    ow = o @ params["W"]
    y = jnp.einsum("bh,bkh->bk", ow, node_emb)
    return y


if __name__ == "__main__":
    NODE_NUM, HIDDEN = 32, 32
    B, L, K = 2, 8, 3  # batch, seq len, #negatives (K+1 candidates)

    key = jax.random.PRNGKey(0)
    kg, kp, kc, kb, kt, kn = jax.random.split(key, 6)

    # Four deterministic edge-index sets, each [2, E].
    E = 48
    gkeys = jax.random.split(kg, 4)
    graphs = [jax.random.randint(gk, (2, E), 0, NODE_NUM, jnp.int32)
              for gk in gkeys]

    params = init_mgnn_params(kp, graphs, HIDDEN, NODE_NUM)

    click_list = jax.random.randint(kc, (B, L), 0, NODE_NUM, jnp.int32)
    buy_list = jax.random.randint(kb, (B, L), 0, NODE_NUM, jnp.int32)
    # guarantee at least one nonzero (non-padding) entry per row
    click_list = click_list.at[:, 0].set(5)
    buy_list = buy_list.at[:, 0].set(7)
    target = jax.random.randint(kt, (B, 1), 0, NODE_NUM, jnp.int32)
    neg = jax.random.randint(kn, (B, K), 0, NODE_NUM, jnp.int32)

    y, label = mgnn_forward(buy_list, click_list, target, neg, params)
    y = jax.block_until_ready(y)
    label = jax.block_until_ready(label)

    y_ref = mgnn_forward_ref(buy_list, click_list, target, neg, params)
    assert y.shape == (B, K + 1) and label.shape == (B, K + 1)
    # Remaining error is only the bf16 MXU operands (f32 accumulation);
    # divisions and the sigmoid are exact now.
    assert jnp.allclose(y, y_ref, atol=5e-3, rtol=3e-2), (y, y_ref)

    print("KERNEL_OK")
</pallas_src>

<mosaic_0001>
module attributes {stable_mosaic.version = 11 : i64} {
  func.func @mgnn_forward_kernel(%arg0: i32, %arg1: memref<8x8xi32, #tpu.memory_space<vmem>>, %arg2: memref<8x8xi32, #tpu.memory_space<vmem>>, %arg3: memref<8x4xi32, #tpu.memory_space<vmem>>, %arg4: memref<128x128xbf16, #tpu.memory_space<vmem>>, %arg5: memref<128x128xbf16, #tpu.memory_space<vmem>>, %arg6: memref<1x128xf32, #tpu.memory_space<vmem>>, %arg7: memref<1x128xf32, #tpu.memory_space<vmem>>, %arg8: memref<128x128xbf16, #tpu.memory_space<vmem>>, %arg9: memref<8x128xf32, #tpu.memory_space<vmem>>) attributes {dimension_semantics = [#tpu.dimension_semantics<parallel>], iteration_bounds = array<i64: 1>, scalar_prefetch = 0 : i64, scratch_operands = 0 : i64, tpu.core_type = #tpu.core_type<tc>, window_params = [{transform_indices = @transform_0, window_bounds = array<i64: 8, 8>}, {transform_indices = @transform_1, window_bounds = array<i64: 8, 8>}, {transform_indices = @transform_2, window_bounds = array<i64: 8, 4>}, {pipeline_mode = #tpu.pipeline_mode<synchronous>, transform_indices = @transform_3, window_bounds = array<i64: 128, 128>}, {pipeline_mode = #tpu.pipeline_mode<synchronous>, transform_indices = @transform_4, window_bounds = array<i64: 128, 128>}, {pipeline_mode = #tpu.pipeline_mode<synchronous>, transform_indices = @transform_5, window_bounds = array<i64: 1, 128>}, {pipeline_mode = #tpu.pipeline_mode<synchronous>, transform_indices = @transform_6, window_bounds = array<i64: 1, 128>}, {pipeline_mode = #tpu.pipeline_mode<synchronous>, transform_indices = @transform_7, window_bounds = array<i64: 128, 128>}, {transform_indices = @transform_8, window_bounds = array<i64: 8, 128>}]} {
    %0 = tpu.iota {dimensions = array<i32: 1>} : vector<8x128xi32>
    %c0 = arith.constant 0 : index
    %c0_0 = arith.constant 0 : index
    %1 = vector.load %arg1[%c0, %c0_0] : memref<8x8xi32, #tpu.memory_space<vmem>>, vector<8x8xi32>
    %c0_1 = arith.constant 0 : index
    %c0_2 = arith.constant 0 : index
    %2 = vector.load %arg2[%c0_1, %c0_2] : memref<8x8xi32, #tpu.memory_space<vmem>>, vector<8x8xi32>
    %cst = arith.constant 0.000000e+00 : f32
    %3 = vector.broadcast %cst : f32 to vector<8x128xf32>
    %cst_3 = arith.constant 0.000000e+00 : f32
    %4 = vector.broadcast %cst_3 : f32 to vector<8x128xf32>
    %5 = vector.extract_strided_slice %1 {offsets = [0, 0], sizes = [8, 1], strides = [1, 1]} : vector<8x8xi32> to vector<8x1xi32>
    %6 = vector.extract_strided_slice %2 {offsets = [0, 0], sizes = [8, 1], strides = [1, 1]} : vector<8x8xi32> to vector<8x1xi32>
    %7 = vector.broadcast %5 : vector<8x1xi32> to vector<8x128xi32>
    %8 = arith.cmpi eq, %7, %0 : vector<8x128xi32>
    %c0_i32 = arith.constant 0 : i32
    %9 = vector.broadcast %c0_i32 : i32 to vector<8x1xi32>
    %10 = arith.cmpi ne, %5, %9 : vector<8x1xi32>
    %11 = vector.broadcast %10 : vector<8x1xi1> to vector<8x128xi1>
    %12 = arith.andi %8, %11 : vector<8x128xi1>
    %13 = arith.extui %12 : vector<8x128xi1> to vector<8x128xi32>
    %14 = arith.sitofp %13 : vector<8x128xi32> to vector<8x128xf32>
    %15 = arith.addf %3, %14 : vector<8x128xf32>
    %16 = vector.broadcast %6 : vector<8x1xi32> to vector<8x128xi32>
    %17 = arith.cmpi eq, %16, %0 : vector<8x128xi32>
    %c0_i32_4 = arith.constant 0 : i32
    %18 = vector.broadcast %c0_i32_4 : i32 to vector<8x1xi32>
    %19 = arith.cmpi ne, %6, %18 : vector<8x1xi32>
    %20 = vector.broadcast %19 : vector<8x1xi1> to vector<8x128xi1>
    %21 = arith.andi %17, %20 : vector<8x128xi1>
    %22 = arith.extui %21 : vector<8x128xi1> to vector<8x128xi32>
    %23 = arith.sitofp %22 : vector<8x128xi32> to vector<8x128xf32>
    %24 = arith.addf %4, %23 : vector<8x128xf32>
    %25 = vector.extract_strided_slice %1 {offsets = [0, 1], sizes = [8, 1], strides = [1, 1]} : vector<8x8xi32> to vector<8x1xi32>
    %26 = vector.extract_strided_slice %2 {offsets = [0, 1], sizes = [8, 1], strides = [1, 1]} : vector<8x8xi32> to vector<8x1xi32>
    %27 = vector.broadcast %25 : vector<8x1xi32> to vector<8x128xi32>
    %28 = arith.cmpi eq, %27, %0 : vector<8x128xi32>
    %c0_i32_5 = arith.constant 0 : i32
    %29 = vector.broadcast %c0_i32_5 : i32 to vector<8x1xi32>
    %30 = arith.cmpi ne, %25, %29 : vector<8x1xi32>
    %31 = vector.broadcast %30 : vector<8x1xi1> to vector<8x128xi1>
    %32 = arith.andi %28, %31 : vector<8x128xi1>
    %33 = arith.extui %32 : vector<8x128xi1> to vector<8x128xi32>
    %34 = arith.sitofp %33 : vector<8x128xi32> to vector<8x128xf32>
    %35 = arith.addf %15, %34 : vector<8x128xf32>
    %36 = vector.broadcast %26 : vector<8x1xi32> to vector<8x128xi32>
    %37 = arith.cmpi eq, %36, %0 : vector<8x128xi32>
    %c0_i32_6 = arith.constant 0 : i32
    %38 = vector.broadcast %c0_i32_6 : i32 to vector<8x1xi32>
    %39 = arith.cmpi ne, %26, %38 : vector<8x1xi32>
    %40 = vector.broadcast %39 : vector<8x1xi1> to vector<8x128xi1>
    %41 = arith.andi %37, %40 : vector<8x128xi1>
    %42 = arith.extui %41 : vector<8x128xi1> to vector<8x128xi32>
    %43 = arith.sitofp %42 : vector<8x128xi32> to vector<8x128xf32>
    %44 = arith.addf %24, %43 : vector<8x128xf32>
    %45 = vector.extract_strided_slice %1 {offsets = [0, 2], sizes = [8, 1], strides = [1, 1]} : vector<8x8xi32> to vector<8x1xi32>
    %46 = vector.extract_strided_slice %2 {offsets = [0, 2], sizes = [8, 1], strides = [1, 1]} : vector<8x8xi32> to vector<8x1xi32>
    %47 = vector.broadcast %45 : vector<8x1xi32> to vector<8x128xi32>
    %48 = arith.cmpi eq, %47, %0 : vector<8x128xi32>
    %c0_i32_7 = arith.constant 0 : i32
    %49 = vector.broadcast %c0_i32_7 : i32 to vector<8x1xi32>
    %50 = arith.cmpi ne, %45, %49 : vector<8x1xi32>
    %51 = vector.broadcast %50 : vector<8x1xi1> to vector<8x128xi1>
    %52 = arith.andi %48, %51 : vector<8x128xi1>
    %53 = arith.extui %52 : vector<8x128xi1> to vector<8x128xi32>
    %54 = arith.sitofp %53 : vector<8x128xi32> to vector<8x128xf32>
    %55 = arith.addf %35, %54 : vector<8x128xf32>
    %56 = vector.broadcast %46 : vector<8x1xi32> to vector<8x128xi32>
    %57 = arith.cmpi eq, %56, %0 : vector<8x128xi32>
    %c0_i32_8 = arith.constant 0 : i32
    %58 = vector.broadcast %c0_i32_8 : i32 to vector<8x1xi32>
    %59 = arith.cmpi ne, %46, %58 : vector<8x1xi32>
    %60 = vector.broadcast %59 : vector<8x1xi1> to vector<8x128xi1>
    %61 = arith.andi %57, %60 : vector<8x128xi1>
    %62 = arith.extui %61 : vector<8x128xi1> to vector<8x128xi32>
    %63 = arith.sitofp %62 : vector<8x128xi32> to vector<8x128xf32>
    %64 = arith.addf %44, %63 : vector<8x128xf32>
    %65 = vector.extract_strided_slice %1 {offsets = [0, 3], sizes = [8, 1], strides = [1, 1]} : vector<8x8xi32> to vector<8x1xi32>
    %66 = vector.extract_strided_slice %2 {offsets = [0, 3], sizes = [8, 1], strides = [1, 1]} : vector<8x8xi32> to vector<8x1xi32>
    %67 = vector.broadcast %65 : vector<8x1xi32> to vector<8x128xi32>
    %68 = arith.cmpi eq, %67, %0 : vector<8x128xi32>
    %c0_i32_9 = arith.constant 0 : i32
    %69 = vector.broadcast %c0_i32_9 : i32 to vector<8x1xi32>
    %70 = arith.cmpi ne, %65, %69 : vector<8x1xi32>
    %71 = vector.broadcast %70 : vector<8x1xi1> to vector<8x128xi1>
    %72 = arith.andi %68, %71 : vector<8x128xi1>
    %73 = arith.extui %72 : vector<8x128xi1> to vector<8x128xi32>
    %74 = arith.sitofp %73 : vector<8x128xi32> to vector<8x128xf32>
    %75 = arith.addf %55, %74 : vector<8x128xf32>
    %76 = vector.broadcast %66 : vector<8x1xi32> to vector<8x128xi32>
    %77 = arith.cmpi eq, %76, %0 : vector<8x128xi32>
    %c0_i32_10 = arith.constant 0 : i32
    %78 = vector.broadcast %c0_i32_10 : i32 to vector<8x1xi32>
    %79 = arith.cmpi ne, %66, %78 : vector<8x1xi32>
    %80 = vector.broadcast %79 : vector<8x1xi1> to vector<8x128xi1>
    %81 = arith.andi %77, %80 : vector<8x128xi1>
    %82 = arith.extui %81 : vector<8x128xi1> to vector<8x128xi32>
    %83 = arith.sitofp %82 : vector<8x128xi32> to vector<8x128xf32>
    %84 = arith.addf %64, %83 : vector<8x128xf32>
    %85 = vector.extract_strided_slice %1 {offsets = [0, 4], sizes = [8, 1], strides = [1, 1]} : vector<8x8xi32> to vector<8x1xi32>
    %86 = vector.extract_strided_slice %2 {offsets = [0, 4], sizes = [8, 1], strides = [1, 1]} : vector<8x8xi32> to vector<8x1xi32>
    %87 = vector.broadcast %85 : vector<8x1xi32> to vector<8x128xi32>
    %88 = arith.cmpi eq, %87, %0 : vector<8x128xi32>
    %c0_i32_11 = arith.constant 0 : i32
    %89 = vector.broadcast %c0_i32_11 : i32 to vector<8x1xi32>
    %90 = arith.cmpi ne, %85, %89 : vector<8x1xi32>
    %91 = vector.broadcast %90 : vector<8x1xi1> to vector<8x128xi1>
    %92 = arith.andi %88, %91 : vector<8x128xi1>
    %93 = arith.extui %92 : vector<8x128xi1> to vector<8x128xi32>
    %94 = arith.sitofp %93 : vector<8x128xi32> to vector<8x128xf32>
    %95 = arith.addf %75, %94 : vector<8x128xf32>
    %96 = vector.broadcast %86 : vector<8x1xi32> to vector<8x128xi32>
    %97 = arith.cmpi eq, %96, %0 : vector<8x128xi32>
    %c0_i32_12 = arith.constant 0 : i32
    %98 = vector.broadcast %c0_i32_12 : i32 to vector<8x1xi32>
    %99 = arith.cmpi ne, %86, %98 : vector<8x1xi32>
    %100 = vector.broadcast %99 : vector<8x1xi1> to vector<8x128xi1>
    %101 = arith.andi %97, %100 : vector<8x128xi1>
    %102 = arith.extui %101 : vector<8x128xi1> to vector<8x128xi32>
    %103 = arith.sitofp %102 : vector<8x128xi32> to vector<8x128xf32>
    %104 = arith.addf %84, %103 : vector<8x128xf32>
    %105 = vector.extract_strided_slice %1 {offsets = [0, 5], sizes = [8, 1], strides = [1, 1]} : vector<8x8xi32> to vector<8x1xi32>
    %106 = vector.extract_strided_slice %2 {offsets = [0, 5], sizes = [8, 1], strides = [1, 1]} : vector<8x8xi32> to vector<8x1xi32>
    %107 = vector.broadcast %105 : vector<8x1xi32> to vector<8x128xi32>
    %108 = arith.cmpi eq, %107, %0 : vector<8x128xi32>
    %c0_i32_13 = arith.constant 0 : i32
    %109 = vector.broadcast %c0_i32_13 : i32 to vector<8x1xi32>
    %110 = arith.cmpi ne, %105, %109 : vector<8x1xi32>
    %111 = vector.broadcast %110 : vector<8x1xi1> to vector<8x128xi1>
    %112 = arith.andi %108, %111 : vector<8x128xi1>
    %113 = arith.extui %112 : vector<8x128xi1> to vector<8x128xi32>
    %114 = arith.sitofp %113 : vector<8x128xi32> to vector<8x128xf32>
    %115 = arith.addf %95, %114 : vector<8x128xf32>
    %116 = vector.broadcast %106 : vector<8x1xi32> to vector<8x128xi32>
    %117 = arith.cmpi eq, %116, %0 : vector<8x128xi32>
    %c0_i32_14 = arith.constant 0 : i32
    %118 = vector.broadcast %c0_i32_14 : i32 to vector<8x1xi32>
    %119 = arith.cmpi ne, %106, %118 : vector<8x1xi32>
    %120 = vector.broadcast %119 : vector<8x1xi1> to vector<8x128xi1>
    %121 = arith.andi %117, %120 : vector<8x128xi1>
    %122 = arith.extui %121 : vector<8x128xi1> to vector<8x128xi32>
    %123 = arith.sitofp %122 : vector<8x128xi32> to vector<8x128xf32>
    %124 = arith.addf %104, %123 : vector<8x128xf32>
    %125 = vector.extract_strided_slice %1 {offsets = [0, 6], sizes = [8, 1], strides = [1, 1]} : vector<8x8xi32> to vector<8x1xi32>
    %126 = vector.extract_strided_slice %2 {offsets = [0, 6], sizes = [8, 1], strides = [1, 1]} : vector<8x8xi32> to vector<8x1xi32>
    %127 = vector.broadcast %125 : vector<8x1xi32> to vector<8x128xi32>
    %128 = arith.cmpi eq, %127, %0 : vector<8x128xi32>
    %c0_i32_15 = arith.constant 0 : i32
    %129 = vector.broadcast %c0_i32_15 : i32 to vector<8x1xi32>
    %130 = arith.cmpi ne, %125, %129 : vector<8x1xi32>
    %131 = vector.broadcast %130 : vector<8x1xi1> to vector<8x128xi1>
    %132 = arith.andi %128, %131 : vector<8x128xi1>
    %133 = arith.extui %132 : vector<8x128xi1> to vector<8x128xi32>
    %134 = arith.sitofp %133 : vector<8x128xi32> to vector<8x128xf32>
    %135 = arith.addf %115, %134 : vector<8x128xf32>
    %136 = vector.broadcast %126 : vector<8x1xi32> to vector<8x128xi32>
    %137 = arith.cmpi eq, %136, %0 : vector<8x128xi32>
    %c0_i32_16 = arith.constant 0 : i32
    %138 = vector.broadcast %c0_i32_16 : i32 to vector<8x1xi32>
    %139 = arith.cmpi ne, %126, %138 : vector<8x1xi32>
    %140 = vector.broadcast %139 : vector<8x1xi1> to vector<8x128xi1>
    %141 = arith.andi %137, %140 : vector<8x128xi1>
    %142 = arith.extui %141 : vector<8x128xi1> to vector<8x128xi32>
    %143 = arith.sitofp %142 : vector<8x128xi32> to vector<8x128xf32>
    %144 = arith.addf %124, %143 : vector<8x128xf32>
    %145 = vector.extract_strided_slice %1 {offsets = [0, 7], sizes = [8, 1], strides = [1, 1]} : vector<8x8xi32> to vector<8x1xi32>
    %146 = vector.extract_strided_slice %2 {offsets = [0, 7], sizes = [8, 1], strides = [1, 1]} : vector<8x8xi32> to vector<8x1xi32>
    %147 = vector.broadcast %145 : vector<8x1xi32> to vector<8x128xi32>
    %148 = arith.cmpi eq, %147, %0 : vector<8x128xi32>
    %c0_i32_17 = arith.constant 0 : i32
    %149 = vector.broadcast %c0_i32_17 : i32 to vector<8x1xi32>
    %150 = arith.cmpi ne, %145, %149 : vector<8x1xi32>
    %151 = vector.broadcast %150 : vector<8x1xi1> to vector<8x128xi1>
    %152 = arith.andi %148, %151 : vector<8x128xi1>
    %153 = arith.extui %152 : vector<8x128xi1> to vector<8x128xi32>
    %154 = arith.sitofp %153 : vector<8x128xi32> to vector<8x128xf32>
    %155 = arith.addf %135, %154 : vector<8x128xf32>
    %156 = vector.broadcast %146 : vector<8x1xi32> to vector<8x128xi32>
    %157 = arith.cmpi eq, %156, %0 : vector<8x128xi32>
    %c0_i32_18 = arith.constant 0 : i32
    %158 = vector.broadcast %c0_i32_18 : i32 to vector<8x1xi32>
    %159 = arith.cmpi ne, %146, %158 : vector<8x1xi32>
    %160 = vector.broadcast %159 : vector<8x1xi1> to vector<8x128xi1>
    %161 = arith.andi %157, %160 : vector<8x128xi1>
    %162 = arith.extui %161 : vector<8x128xi1> to vector<8x128xi32>
    %163 = arith.sitofp %162 : vector<8x128xi32> to vector<8x128xf32>
    %164 = arith.addf %144, %163 : vector<8x128xf32>
    %165 = tpu.concatenate %155, %164 in 0 : vector<8x128xf32>, vector<8x128xf32> -> vector<16x128xf32>
    %166 = arith.truncf %165 : vector<16x128xf32> to vector<16x128xbf16>
    %c0_19 = arith.constant 0 : index
    %c0_20 = arith.constant 0 : index
    %167 = vector.load %arg4[%c0_19, %c0_20] : memref<128x128xbf16, #tpu.memory_space<vmem>>, vector<128x128xbf16>
    %cst_21 = arith.constant dense<0.000000e+00> : vector<16x128xf32>
    %168 = tpu.matmul %166, %167, %cst_21 {dimension_numbers = #tpu.dot_dimension_numbers<[1], [0], [0], [1], [0, 0, 1, 1], [], []>} : vector<16x128xbf16>, vector<128x128xbf16>, vector<16x128xf32> -> vector<16x128xf32>
    %c0_i32_22 = arith.constant 0 : i32
    %169 = vector.broadcast %c0_i32_22 : i32 to vector<8x8xi32>
    %170 = arith.cmpi ne, %1, %169 : vector<8x8xi32>
    %171 = arith.extui %170 : vector<8x8xi1> to vector<8x8xi32>
    %172 = arith.sitofp %171 : vector<8x8xi32> to vector<8x8xf32>
    %cst_23 = arith.constant dense<0.000000e+00> : vector<8xf32>
    %173 = vector.multi_reduction <add>, %172, %cst_23 [1] : vector<8x8xf32> to vector<8xf32>
    %174 = vector.shape_cast %173 : vector<8xf32> to vector<8x1xf32>
    %c0_i32_24 = arith.constant 0 : i32
    %175 = vector.broadcast %c0_i32_24 : i32 to vector<8x8xi32>
    %176 = arith.cmpi ne, %2, %175 : vector<8x8xi32>
    %177 = arith.extui %176 : vector<8x8xi1> to vector<8x8xi32>
    %178 = arith.sitofp %177 : vector<8x8xi32> to vector<8x8xf32>
    %cst_25 = arith.constant dense<0.000000e+00> : vector<8xf32>
    %179 = vector.multi_reduction <add>, %178, %cst_25 [1] : vector<8x8xf32> to vector<8xf32>
    %180 = vector.shape_cast %179 : vector<8xf32> to vector<8x1xf32>
    %181 = vector.extract_strided_slice %168 {offsets = [0, 0], sizes = [8, 128], strides = [1, 1]} : vector<16x128xf32> to vector<8x128xf32>
    %cst_26 = arith.constant 1.000000e+00 : f32
    %182 = vector.broadcast %cst_26 : f32 to vector<8x1xf32>
    %183 = arith.maximumf %174, %182 : vector<8x1xf32>
    %184 = vector.broadcast %183 : vector<8x1xf32> to vector<8x128xf32>
    %185 = arith.divf %181, %184 : vector<8x128xf32>
    %186 = vector.extract_strided_slice %168 {offsets = [8, 0], sizes = [8, 128], strides = [1, 1]} : vector<16x128xf32> to vector<8x128xf32>
    %cst_27 = arith.constant 1.000000e+00 : f32
    %187 = vector.broadcast %cst_27 : f32 to vector<8x1xf32>
    %188 = arith.maximumf %180, %187 : vector<8x1xf32>
    %189 = vector.broadcast %188 : vector<8x1xf32> to vector<8x128xf32>
    %190 = arith.divf %186, %189 : vector<8x128xf32>
    %c0_28 = arith.constant 0 : index
    %c0_29 = arith.constant 0 : index
    %191 = vector.load %arg6[%c0_28, %c0_29] : memref<1x128xf32, #tpu.memory_space<vmem>>, vector<1x128xf32>
    %192 = vector.broadcast %191 : vector<1x128xf32> to vector<8x128xf32>
    %193 = arith.mulf %185, %192 : vector<8x128xf32>
    %c0_30 = arith.constant 0 : index
    %c0_31 = arith.constant 0 : index
    %194 = vector.load %arg7[%c0_30, %c0_31] : memref<1x128xf32, #tpu.memory_space<vmem>>, vector<1x128xf32>
    %195 = vector.broadcast %194 : vector<1x128xf32> to vector<8x128xf32>
    %196 = arith.mulf %190, %195 : vector<8x128xf32>
    %197 = arith.addf %193, %196 : vector<8x128xf32>
    %cst_32 = arith.constant dense<0.000000e+00> : vector<8xf32>
    %198 = vector.multi_reduction <add>, %197, %cst_32 [1] : vector<8x128xf32> to vector<8xf32>
    %199 = vector.shape_cast %198 : vector<8xf32> to vector<8x1xf32>
    %cst_33 = arith.constant 0.000000e+00 : f32
    %200 = vector.broadcast %cst_33 : f32 to vector<8x1xf32>
    %201 = arith.subf %200, %199 : vector<8x1xf32>
    %202 = math.exp %201 : vector<8x1xf32>
    %cst_34 = arith.constant 1.000000e+00 : f32
    %203 = vector.broadcast %cst_34 : f32 to vector<8x1xf32>
    %204 = arith.addf %203, %202 : vector<8x1xf32>
    %cst_35 = arith.constant 1.000000e+00 : f32
    %205 = vector.broadcast %cst_35 : f32 to vector<8x1xf32>
    %206 = arith.divf %205, %204 : vector<8x1xf32>
    %207 = vector.broadcast %206 : vector<8x1xf32> to vector<8x128xf32>
    %208 = arith.mulf %207, %185 : vector<8x128xf32>
    %cst_36 = arith.constant 1.000000e+00 : f32
    %209 = vector.broadcast %cst_36 : f32 to vector<8x1xf32>
    %210 = arith.subf %209, %206 : vector<8x1xf32>
    %211 = vector.broadcast %210 : vector<8x1xf32> to vector<8x128xf32>
    %212 = arith.mulf %211, %190 : vector<8x128xf32>
    %213 = arith.addf %208, %212 : vector<8x128xf32>
    %214 = arith.truncf %213 : vector<8x128xf32> to vector<8x128xbf16>
    %c0_37 = arith.constant 0 : index
    %c0_38 = arith.constant 0 : index
    %215 = vector.load %arg8[%c0_37, %c0_38] : memref<128x128xbf16, #tpu.memory_space<vmem>>, vector<128x128xbf16>
    %cst_39 = arith.constant dense<0.000000e+00> : vector<8x128xf32>
    %216 = tpu.matmul %214, %215, %cst_39 {dimension_numbers = #tpu.dot_dimension_numbers<[1], [0], [0], [1], [0, 0, 1, 1], [], []>} : vector<8x128xbf16>, vector<128x128xbf16>, vector<8x128xf32> -> vector<8x128xf32>
    %217 = arith.truncf %216 : vector<8x128xf32> to vector<8x128xbf16>
    %c0_40 = arith.constant 0 : index
    %c0_41 = arith.constant 0 : index
    %218 = vector.load %arg5[%c0_40, %c0_41] : memref<128x128xbf16, #tpu.memory_space<vmem>>, vector<128x128xbf16>
    %cst_42 = arith.constant dense<0.000000e+00> : vector<8x128xf32>
    %219 = tpu.matmul %217, %218, %cst_42 {dimension_numbers = #tpu.dot_dimension_numbers<[1], [0], [0], [1], [0, 0, 1, 1], [], []>} : vector<8x128xbf16>, vector<128x128xbf16>, vector<8x128xf32> -> vector<8x128xf32>
    %c0_43 = arith.constant 0 : index
    %c0_44 = arith.constant 0 : index
    %220 = vector.load %arg3[%c0_43, %c0_44] : memref<8x4xi32, #tpu.memory_space<vmem>>, vector<8x4xi32>
    %221 = tpu.iota {dimensions = array<i32: 1>} : vector<8x128xi32>
    %cst_45 = arith.constant 0.000000e+00 : f32
    %222 = vector.broadcast %cst_45 : f32 to vector<8x128xf32>
    %223 = vector.extract_strided_slice %220 {offsets = [0, 0], sizes = [8, 1], strides = [1, 1]} : vector<8x4xi32> to vector<8x1xi32>
    %224 = vector.broadcast %223 : vector<8x1xi32> to vector<8x128xi32>
    %225 = arith.cmpi eq, %0, %224 : vector<8x128xi32>
    %cst_46 = arith.constant 0.000000e+00 : f32
    %226 = vector.broadcast %cst_46 : f32 to vector<8x128xf32>
    %227 = arith.select %225, %219, %226 : vector<8x128xi1>, vector<8x128xf32>
    %cst_47 = arith.constant dense<0.000000e+00> : vector<8xf32>
    %228 = vector.multi_reduction <add>, %227, %cst_47 [1] : vector<8x128xf32> to vector<8xf32>
    %229 = vector.shape_cast %228 : vector<8xf32> to vector<8x1xf32>
    %c0_i32_48 = arith.constant 0 : i32
    %230 = vector.broadcast %c0_i32_48 : i32 to vector<8x128xi32>
    %231 = arith.cmpi eq, %221, %230 : vector<8x128xi32>
    %cst_49 = arith.constant 0.000000e+00 : f32
    %232 = vector.shape_cast %229 : vector<8x1xf32> to vector<8x1xf32>
    %233 = vector.broadcast %232 : vector<8x1xf32> to vector<8x128xf32>
    %234 = vector.broadcast %cst_49 : f32 to vector<8x128xf32>
    %235 = arith.select %231, %233, %234 : vector<8x128xi1>, vector<8x128xf32>
    %236 = arith.addf %222, %235 : vector<8x128xf32>
    %237 = vector.extract_strided_slice %220 {offsets = [0, 1], sizes = [8, 1], strides = [1, 1]} : vector<8x4xi32> to vector<8x1xi32>
    %238 = vector.broadcast %237 : vector<8x1xi32> to vector<8x128xi32>
    %239 = arith.cmpi eq, %0, %238 : vector<8x128xi32>
    %cst_50 = arith.constant 0.000000e+00 : f32
    %240 = vector.broadcast %cst_50 : f32 to vector<8x128xf32>
    %241 = arith.select %239, %219, %240 : vector<8x128xi1>, vector<8x128xf32>
    %cst_51 = arith.constant dense<0.000000e+00> : vector<8xf32>
    %242 = vector.multi_reduction <add>, %241, %cst_51 [1] : vector<8x128xf32> to vector<8xf32>
    %243 = vector.shape_cast %242 : vector<8xf32> to vector<8x1xf32>
    %c1_i32 = arith.constant 1 : i32
    %244 = vector.broadcast %c1_i32 : i32 to vector<8x128xi32>
    %245 = arith.cmpi eq, %221, %244 : vector<8x128xi32>
    %cst_52 = arith.constant 0.000000e+00 : f32
    %246 = vector.shape_cast %243 : vector<8x1xf32> to vector<8x1xf32>
    %247 = vector.broadcast %246 : vector<8x1xf32> to vector<8x128xf32>
    %248 = vector.broadcast %cst_52 : f32 to vector<8x128xf32>
    %249 = arith.select %245, %247, %248 : vector<8x128xi1>, vector<8x128xf32>
    %250 = arith.addf %236, %249 : vector<8x128xf32>
    %251 = vector.extract_strided_slice %220 {offsets = [0, 2], sizes = [8, 1], strides = [1, 1]} : vector<8x4xi32> to vector<8x1xi32>
    %252 = vector.broadcast %251 : vector<8x1xi32> to vector<8x128xi32>
    %253 = arith.cmpi eq, %0, %252 : vector<8x128xi32>
    %cst_53 = arith.constant 0.000000e+00 : f32
    %254 = vector.broadcast %cst_53 : f32 to vector<8x128xf32>
    %255 = arith.select %253, %219, %254 : vector<8x128xi1>, vector<8x128xf32>
    %cst_54 = arith.constant dense<0.000000e+00> : vector<8xf32>
    %256 = vector.multi_reduction <add>, %255, %cst_54 [1] : vector<8x128xf32> to vector<8xf32>
    %257 = vector.shape_cast %256 : vector<8xf32> to vector<8x1xf32>
    %c2_i32 = arith.constant 2 : i32
    %258 = vector.broadcast %c2_i32 : i32 to vector<8x128xi32>
    %259 = arith.cmpi eq, %221, %258 : vector<8x128xi32>
    %cst_55 = arith.constant 0.000000e+00 : f32
    %260 = vector.shape_cast %257 : vector<8x1xf32> to vector<8x1xf32>
    %261 = vector.broadcast %260 : vector<8x1xf32> to vector<8x128xf32>
    %262 = vector.broadcast %cst_55 : f32 to vector<8x128xf32>
    %263 = arith.select %259, %261, %262 : vector<8x128xi1>, vector<8x128xf32>
    %264 = arith.addf %250, %263 : vector<8x128xf32>
    %265 = vector.extract_strided_slice %220 {offsets = [0, 3], sizes = [8, 1], strides = [1, 1]} : vector<8x4xi32> to vector<8x1xi32>
    %266 = vector.broadcast %265 : vector<8x1xi32> to vector<8x128xi32>
    %267 = arith.cmpi eq, %0, %266 : vector<8x128xi32>
    %cst_56 = arith.constant 0.000000e+00 : f32
    %268 = vector.broadcast %cst_56 : f32 to vector<8x128xf32>
    %269 = arith.select %267, %219, %268 : vector<8x128xi1>, vector<8x128xf32>
    %cst_57 = arith.constant dense<0.000000e+00> : vector<8xf32>
    %270 = vector.multi_reduction <add>, %269, %cst_57 [1] : vector<8x128xf32> to vector<8xf32>
    %271 = vector.shape_cast %270 : vector<8xf32> to vector<8x1xf32>
    %c3_i32 = arith.constant 3 : i32
    %272 = vector.broadcast %c3_i32 : i32 to vector<8x128xi32>
    %273 = arith.cmpi eq, %221, %272 : vector<8x128xi32>
    %cst_58 = arith.constant 0.000000e+00 : f32
    %274 = vector.shape_cast %271 : vector<8x1xf32> to vector<8x1xf32>
    %275 = vector.broadcast %274 : vector<8x1xf32> to vector<8x128xf32>
    %276 = vector.broadcast %cst_58 : f32 to vector<8x128xf32>
    %277 = arith.select %273, %275, %276 : vector<8x128xi1>, vector<8x128xf32>
    %278 = arith.addf %264, %277 : vector<8x128xf32>
    %c0_59 = arith.constant 0 : index
    %c0_60 = arith.constant 0 : index
    %279 = vector.load %arg9[%c0_59, %c0_60] : memref<8x128xf32, #tpu.memory_space<vmem>>, vector<8x128xf32>
    tpu.vector_store %arg9[%c0_59, %c0_60], %278 {strides = array<i32>} : memref<8x128xf32, #tpu.memory_space<vmem>>, vector<8x128xf32>,
    return
  }
  func.func @transform_0(%arg0: i32) -> (i32, i32) {
    %c0_i32 = arith.constant 0 : i32
    %c0_i32_0 = arith.constant 0 : i32
    return %arg0, %c0_i32 : i32, i32
  }
  func.func @transform_1(%arg0: i32) -> (i32, i32) {
    %c0_i32 = arith.constant 0 : i32
    %c0_i32_0 = arith.constant 0 : i32
    return %arg0, %c0_i32 : i32, i32
  }
  func.func @transform_2(%arg0: i32) -> (i32, i32) {
    %c0_i32 = arith.constant 0 : i32
    %c0_i32_0 = arith.constant 0 : i32
    return %arg0, %c0_i32 : i32, i32
  }
  func.func @transform_3(%arg0: i32) -> (i32, i32) {
    %c0_i32 = arith.constant 0 : i32
    %c0_i32_0 = arith.constant 0 : i32
    %c0_i32_1 = arith.constant 0 : i32
    return %c0_i32, %c0_i32_0 : i32, i32
  }
  func.func @transform_4(%arg0: i32) -> (i32, i32) {
    %c0_i32 = arith.constant 0 : i32
    %c0_i32_0 = arith.constant 0 : i32
    %c0_i32_1 = arith.constant 0 : i32
    return %c0_i32, %c0_i32_0 : i32, i32
  }
  func.func @transform_5(%arg0: i32) -> (i32, i32) {
    %c0_i32 = arith.constant 0 : i32
    %c0_i32_0 = arith.constant 0 : i32
    %c0_i32_1 = arith.constant 0 : i32
    return %c0_i32, %c0_i32_0 : i32, i32
  }
  func.func @transform_6(%arg0: i32) -> (i32, i32) {
    %c0_i32 = arith.constant 0 : i32
    %c0_i32_0 = arith.constant 0 : i32
    %c0_i32_1 = arith.constant 0 : i32
    return %c0_i32, %c0_i32_0 : i32, i32
  }
  func.func @transform_7(%arg0: i32) -> (i32, i32) {
    %c0_i32 = arith.constant 0 : i32
    %c0_i32_0 = arith.constant 0 : i32
    %c0_i32_1 = arith.constant 0 : i32
    return %c0_i32, %c0_i32_0 : i32, i32
  }
  func.func @transform_8(%arg0: i32) -> (i32, i32) {
    %c0_i32 = arith.constant 0 : i32
    %c0_i32_0 = arith.constant 0 : i32
    return %arg0, %c0_i32 : i32, i32
  }
}

</mosaic_0001>

<llo_original>
// kernel: tpu_custom_call.1
$region0: #{tpu_custom_call.1}
  #allocation0 [shape = 'u32[]', space=smem, size = 0x4, offset = 0x4, fixed_abs, tag = 'smem constant byte address 0x4 - core index']
  #allocation1 [shape = 'u32[144,128]{1,0:T(1,128)}', space=vmem, size = 0x12000, scoped, tag = 'internal scratch']
  %s0 = inlined_call_operand.vmem [shape: s32[8,8], index: 0, kind: input, shape index: {}]
  %s1 = inlined_call_operand.hbm [shape: s32[8,8], index: 1, kind: input, shape index: {}]
  %s2 = inlined_call_operand.vmem [shape: s32[8,4], index: 2, kind: input, shape index: {}]
  %s3 = inlined_call_operand.hbm [shape: bf16[128,128], index: 3, kind: input, shape index: {}]
  %s4 = inlined_call_operand.hbm [shape: bf16[128,128], index: 4, kind: input, shape index: {}]
  %s5 = inlined_call_operand.vmem [shape: f32[1,128], index: 5, kind: input, shape index: {}]
  %s6 = inlined_call_operand.vmem [shape: f32[1,128], index: 6, kind: input, shape index: {}]
  %s7 = inlined_call_operand.hbm [shape: bf16[128,128], index: 7, kind: input, shape index: {}]
  %s8 = inlined_call_operand.hbm [shape: f32[8,128], index: 8, kind: output, shape index: {}]
  %s9 = sld [smem:[#allocation0]]
  $region58: #{tpu_custom_call.1} parent=0
    _
  %s11 = ssub.s32 1, %s9
  %s12 = scalar_select 0, %s11, %s9
  $region1: #{tpu_custom_call.1} parent=0
    #allocation2 [shape = 'u8[4096]{0}', space=vmem, size = 0x1000, scoped, tag = 'input window, operand 1, single buffered']
    #allocation3 [shape = 's32[1]{0}', space=sflag, size = 0x4, scoped, tag = 'scoped memory for tpu_custom_call.1']
    #allocation4 [shape = 's32[1]{0}', space=sflag, size = 0x4, scoped, tag = 'scoped memory for tpu_custom_call.1']
    #allocation5 [shape = 'u8[32768]{0}', space=vmem, size = 0x8000, scoped, tag = 'input window, operand 3, single buffered']
    #allocation6 [shape = 's32[1]{0}', space=sflag, size = 0x4, scoped, tag = 'scoped memory for tpu_custom_call.1']
    #allocation7 [shape = 'u8[32768]{0}', space=vmem, size = 0x8000, scoped, tag = 'input window, operand 4, single buffered']
    #allocation8 [shape = 'u8[32768]{0}', space=vmem, size = 0x8000, scoped, tag = 'input window, operand 7, single buffered']
    #allocation9 [shape = 's32[1]{0}', space=sflag, size = 0x4, scoped, tag = 'scoped memory for tpu_custom_call.1']
    #allocation10 [shape = 'u8[4096]{0}', space=vmem, size = 0x1000, scoped, tag = 'output window, operand 0, single buffered']
    %13 = vsyncpa [#allocation3], 0
    %14 = vsyncpa [#allocation6], 0
    %15 = vsyncpa [#allocation9], 0
    %16 = vsyncpa [#allocation4], 0
    // Predicated region
    $region2: #{tpu_custom_call.1} parent=1 // pred_check
      _
    $region3: #{tpu_custom_call.1} parent=1 // pred_check_branch
      %18 = sbr.rel (0) target = $region5
    $region4: #{tpu_custom_call.1} parent=1 // pred_region
      _
    $region5: #{tpu_custom_call.1} parent=1 // pred_fallthru
      _
    // Predicated region
    $region6: #{tpu_custom_call.1} parent=1 // pred_check
      _
    $region7: #{tpu_custom_call.1} parent=1 // pred_check_branch
      %20 = sbr.rel (0) target = $region9
    $region8: #{tpu_custom_call.1} parent=1 // pred_region
      %s22 = ssub.s32 128, 128
      %23 = vsyncadd [#allocation3], %s22
      %s25 = sshll.u32 [#allocation2], 4
      %s26 = int_to_ptr.vmem [resolvable:$true] %s25
      %28 = dma.hbm_to_vmem [thread:$0]  %s1, 128, %s26, [#allocation3]
    $region9: #{tpu_custom_call.1} parent=1 // pred_fallthru
      _
    // Predicated region
    $region10: #{tpu_custom_call.1} parent=1 // pred_check
      _
    $region11: #{tpu_custom_call.1} parent=1 // pred_check_branch
      %30 = sbr.rel (0) target = $region13
    $region12: #{tpu_custom_call.1} parent=1 // pred_region
      _
    $region13: #{tpu_custom_call.1} parent=1 // pred_fallthru
      _
    // Predicated region
    $region14: #{tpu_custom_call.1} parent=1 // pred_check
      _
    $region15: #{tpu_custom_call.1} parent=1 // pred_check_branch
      %32 = sbr.rel (0) target = $region17
    $region16: #{tpu_custom_call.1} parent=1 // pred_region
      %s34 = ssub.s32 1024, 1024
      %35 = vsyncadd [#allocation6], %s34
      %s36 = sshll.u32 [#allocation5], 4
      %s37 = int_to_ptr.vmem [resolvable:$true] %s36
      %42 = dma.hbm_to_vmem [thread:$0]  %s3, 1024, %s37, [#allocation6], 64, 64, 4
    $region17: #{tpu_custom_call.1} parent=1 // pred_fallthru
      _
    // Predicated region
    $region18: #{tpu_custom_call.1} parent=1 // pred_check
      _
    $region19: #{tpu_custom_call.1} parent=1 // pred_check_branch
      %44 = sbr.rel (0) target = $region21
    $region20: #{tpu_custom_call.1} parent=1 // pred_region
      %s46 = ssub.s32 1024, 1024
      %47 = vsyncadd [#allocation6], %s46
      %s48 = sshll.u32 [#allocation7], 4
      %s49 = int_to_ptr.vmem [resolvable:$true] %s48
      %54 = dma.hbm_to_vmem [thread:$0]  %s4, 1024, %s49, [#allocation6], 64, 64, 4
    $region21: #{tpu_custom_call.1} parent=1 // pred_fallthru
      _
    // Predicated region
    $region22: #{tpu_custom_call.1} parent=1 // pred_check
      _
    $region23: #{tpu_custom_call.1} parent=1 // pred_check_branch
      %56 = sbr.rel (0) target = $region25
    $region24: #{tpu_custom_call.1} parent=1 // pred_region
      _
    $region25: #{tpu_custom_call.1} parent=1 // pred_fallthru
      _
    // Predicated region
    $region26: #{tpu_custom_call.1} parent=1 // pred_check
      _
    $region27: #{tpu_custom_call.1} parent=1 // pred_check_branch
      %58 = sbr.rel (0) target = $region29
    $region28: #{tpu_custom_call.1} parent=1 // pred_region
      _
    $region29: #{tpu_custom_call.1} parent=1 // pred_fallthru
      _
    // Predicated region
    $region30: #{tpu_custom_call.1} parent=1 // pred_check
      _
    $region31: #{tpu_custom_call.1} parent=1 // pred_check_branch
      %60 = sbr.rel (0) target = $region33
    $region32: #{tpu_custom_call.1} parent=1 // pred_region
      %s62 = ssub.s32 1024, 1024
      %63 = vsyncadd [#allocation9], %s62
      %s64 = sshll.u32 [#allocation8], 4
      %s65 = int_to_ptr.vmem [resolvable:$true] %s64
      %70 = dma.hbm_to_vmem [thread:$0]  %s7, 1024, %s65, [#allocation9], 64, 64, 4
    $region33: #{tpu_custom_call.1} parent=1 // pred_fallthru
      _
    // Predicated region
    $region34: #{tpu_custom_call.1} parent=1 // pred_check
      _
    $region35: #{tpu_custom_call.1} parent=1 // pred_check_branch
      %72 = sbr.rel (0) target = $region37
    $region36: #{tpu_custom_call.1} parent=1 // pred_region
      %73 = dma.done [#allocation3], 128
    $region37: #{tpu_custom_call.1} parent=1 // pred_fallthru
      _
    // Predicated region
    $region38: #{tpu_custom_call.1} parent=1 // pred_check
      _
    $region39: #{tpu_custom_call.1} parent=1 // pred_check_branch
      %75 = sbr.rel (0) target = $region41
    $region40: #{tpu_custom_call.1} parent=1 // pred_region
      %76 = dma.done [#allocation6], 1024
    $region41: #{tpu_custom_call.1} parent=1 // pred_fallthru
      _
    // Predicated region
    $region42: #{tpu_custom_call.1} parent=1 // pred_check
      _
    $region43: #{tpu_custom_call.1} parent=1 // pred_check_branch
      %78 = sbr.rel (0) target = $region45
    $region44: #{tpu_custom_call.1} parent=1 // pred_region
      %79 = dma.done [#allocation6], 1024
    $region45: #{tpu_custom_call.1} parent=1 // pred_fallthru
      _
    // Predicated region
    $region46: #{tpu_custom_call.1} parent=1 // pred_check
      _
    $region47: #{tpu_custom_call.1} parent=1 // pred_check_branch
      %81 = sbr.rel (0) target = $region49
    $region48: #{tpu_custom_call.1} parent=1 // pred_region
      %82 = dma.done [#allocation9], 1024
    $region49: #{tpu_custom_call.1} parent=1 // pred_fallthru
      _
    %v84 = vlaneseq
    %v85 = vand.u32 %v84, 127
    %v86 = vld [vmem:[%s0] sm:$0xff]
    %v87 = vld [vmem:[#allocation2] sm:$0xff]
    %88 = vset.pattern.permute.xlu0 0
    %89 = vperm.xlu0 %88, %v86
    %v90 = vpop.permute.xlu0 %89
    %vm91 = vcmp.eq.s32.totalorder %v90, %v85
    %vm92 = vcmp.ne.s32.totalorder %v86, 0
    %v93 = vsel %vm92, 1, 0
    %94 = vset.pattern.permute.xlu0 0
    %95 = vperm.xlu0 %94, %v93
    %v96 = vpop.permute.xlu0 %95
    %vm97 = vcmp.eq.s32.totalorder %v96, 1
    %vm98 = vmand %vm91, %vm97
    %v99 = vsel %vm98, 1, 0
    %v100 = vcvt.s32.f32 %v99
    %v101 = vadd.f32 %v100, 0.0
    %102 = vset.pattern.permute.xlu0 0
    %103 = vperm.xlu0 %102, %v87
    %v104 = vpop.permute.xlu0 %103
    %vm105 = vcmp.eq.s32.totalorder %v104, %v85
    %vm106 = vcmp.ne.s32.totalorder %v87, 0
    %v107 = vsel %vm106, 1, 0
    %108 = vset.pattern.permute.xlu0 0
    %109 = vperm.xlu0 %108, %v107
    %v110 = vpop.permute.xlu0 %109
    %vm111 = vcmp.eq.s32.totalorder %v110, 1
    %vm112 = vmand %vm105, %vm111
    %v113 = vsel %vm112, 1, 0
    %v114 = vcvt.s32.f32 %v113
    %v115 = vadd.f32 %v114, 0.0
    %116 = vset.pattern.permute.xlu0 1
    %117 = vperm.xlu0 %116, %v86
    %v118 = vpop.permute.xlu0 %117
    %vm119 = vcmp.eq.s32.totalorder %v118, %v85
    %120 = vset.pattern.permute.xlu0 1
    %121 = vperm.xlu0 %120, %v93
    %v122 = vpop.permute.xlu0 %121
    %vm123 = vcmp.eq.s32.totalorder %v122, 1
    %vm124 = vmand %vm119, %vm123
    %v125 = vsel %vm124, 1, 0
    %v126 = vcvt.s32.f32 %v125
    %v127 = vadd.f32 %v101, %v126
    %128 = vset.pattern.permute.xlu0 1
    %129 = vperm.xlu0 %128, %v87
    %v130 = vpop.permute.xlu0 %129
    %vm131 = vcmp.eq.s32.totalorder %v130, %v85
    %132 = vset.pattern.permute.xlu0 1
    %133 = vperm.xlu0 %132, %v107
    %v134 = vpop.permute.xlu0 %133
    %vm135 = vcmp.eq.s32.totalorder %v134, 1
    %vm136 = vmand %vm131, %vm135
    %v137 = vsel %vm136, 1, 0
    %v138 = vcvt.s32.f32 %v137
    %v139 = vadd.f32 %v115, %v138
    %140 = vset.pattern.permute.xlu0 2
    %141 = vperm.xlu0 %140, %v86
    %v142 = vpop.permute.xlu0 %141
    %vm143 = vcmp.eq.s32.totalorder %v142, %v85
    %144 = vset.pattern.permute.xlu0 2
    %145 = vperm.xlu0 %144, %v93
    %v146 = vpop.permute.xlu0 %145
    %vm147 = vcmp.eq.s32.totalorder %v146, 1
    %vm148 = vmand %vm143, %vm147
    %v149 = vsel %vm148, 1, 0
    %v150 = vcvt.s32.f32 %v149
    %v151 = vadd.f32 %v127, %v150
    %152 = vset.pattern.permute.xlu0 2
    %153 = vperm.xlu0 %152, %v87
    %v154 = vpop.permute.xlu0 %153
    %vm155 = vcmp.eq.s32.totalorder %v154, %v85
    %156 = vset.pattern.permute.xlu0 2
    %157 = vperm.xlu0 %156, %v107
    %v158 = vpop.permute.xlu0 %157
    %vm159 = vcmp.eq.s32.totalorder %v158, 1
    %vm160 = vmand %vm155, %vm159
    %v161 = vsel %vm160, 1, 0
    %v162 = vcvt.s32.f32 %v161
    %v163 = vadd.f32 %v139, %v162
    %164 = vset.pattern.permute.xlu0 3
    %165 = vperm.xlu0 %164, %v86
    %v166 = vpop.permute.xlu0 %165
    %vm167 = vcmp.eq.s32.totalorder %v166, %v85
    %168 = vset.pattern.permute.xlu0 3
    %169 = vperm.xlu0 %168, %v93
    %v170 = vpop.permute.xlu0 %169
    %vm171 = vcmp.eq.s32.totalorder %v170, 1
    %vm172 = vmand %vm167, %vm171
    %v173 = vsel %vm172, 1, 0
    %v174 = vcvt.s32.f32 %v173
    %v175 = vadd.f32 %v151, %v174
    %176 = vset.pattern.permute.xlu0 3
    %177 = vperm.xlu0 %176, %v87
    %v178 = vpop.permute.xlu0 %177
    %vm179 = vcmp.eq.s32.totalorder %v178, %v85
    %180 = vset.pattern.permute.xlu0 3
    %181 = vperm.xlu0 %180, %v107
    %v182 = vpop.permute.xlu0 %181
    %vm183 = vcmp.eq.s32.totalorder %v182, 1
    %vm184 = vmand %vm179, %vm183
    %v185 = vsel %vm184, 1, 0
    %v186 = vcvt.s32.f32 %v185
    %v187 = vadd.f32 %v163, %v186
    %188 = vset.pattern.permute.xlu0 4
    %189 = vperm.xlu0 %188, %v86
    %v190 = vpop.permute.xlu0 %189
    %vm191 = vcmp.eq.s32.totalorder %v190, %v85
    %192 = vset.pattern.permute.xlu0 4
    %193 = vperm.xlu0 %192, %v93
    %v194 = vpop.permute.xlu0 %193
    %vm195 = vcmp.eq.s32.totalorder %v194, 1
    %vm196 = vmand %vm191, %vm195
    %v197 = vsel %vm196, 1, 0
    %v198 = vcvt.s32.f32 %v197
    %v199 = vadd.f32 %v175, %v198
    %200 = vset.pattern.permute.xlu0 4
    %201 = vperm.xlu0 %200, %v87
    %v202 = vpop.permute.xlu0 %201
    %vm203 = vcmp.eq.s32.totalorder %v202, %v85
    %204 = vset.pattern.permute.xlu0 4
    %205 = vperm.xlu0 %204, %v107
    %v206 = vpop.permute.xlu0 %205
    %vm207 = vcmp.eq.s32.totalorder %v206, 1
    %vm208 = vmand %vm203, %vm207
    %v209 = vsel %vm208, 1, 0
    %v210 = vcvt.s32.f32 %v209
    %v211 = vadd.f32 %v187, %v210
    %212 = vset.pattern.permute.xlu0 5
    %213 = vperm.xlu0 %212, %v86
    %v214 = vpop.permute.xlu0 %213
    %vm215 = vcmp.eq.s32.totalorder %v214, %v85
    %216 = vset.pattern.permute.xlu0 5
    %217 = vperm.xlu0 %216, %v93
    %v218 = vpop.permute.xlu0 %217
    %vm219 = vcmp.eq.s32.totalorder %v218, 1
    %vm220 = vmand %vm215, %vm219
    %v221 = vsel %vm220, 1, 0
    %v222 = vcvt.s32.f32 %v221
    %v223 = vadd.f32 %v199, %v222
    %224 = vset.pattern.permute.xlu0 5
    %225 = vperm.xlu0 %224, %v87
    %v226 = vpop.permute.xlu0 %225
    %vm227 = vcmp.eq.s32.totalorder %v226, %v85
    %228 = vset.pattern.permute.xlu0 5
    %229 = vperm.xlu0 %228, %v107
    %v230 = vpop.permute.xlu0 %229
    %vm231 = vcmp.eq.s32.totalorder %v230, 1
    %vm232 = vmand %vm227, %vm231
    %v233 = vsel %vm232, 1, 0
    %v234 = vcvt.s32.f32 %v233
    %v235 = vadd.f32 %v211, %v234
    %236 = vset.pattern.permute.xlu0 6
    %237 = vperm.xlu0 %236, %v86
    %v238 = vpop.permute.xlu0 %237
    %vm239 = vcmp.eq.s32.totalorder %v238, %v85
    %240 = vset.pattern.permute.xlu0 6
    %241 = vperm.xlu0 %240, %v93
    %v242 = vpop.permute.xlu0 %241
    %vm243 = vcmp.eq.s32.totalorder %v242, 1
    %vm244 = vmand %vm239, %vm243
    %v245 = vsel %vm244, 1, 0
    %v246 = vcvt.s32.f32 %v245
    %v247 = vadd.f32 %v223, %v246
    %248 = vset.pattern.permute.xlu0 6
    %249 = vperm.xlu0 %248, %v87
    %v250 = vpop.permute.xlu0 %249
    %vm251 = vcmp.eq.s32.totalorder %v250, %v85
    %252 = vset.pattern.permute.xlu0 6
    %253 = vperm.xlu0 %252, %v107
    %v254 = vpop.permute.xlu0 %253
    %vm255 = vcmp.eq.s32.totalorder %v254, 1
    %vm256 = vmand %vm251, %vm255
    %v257 = vsel %vm256, 1, 0
    %v258 = vcvt.s32.f32 %v257
    %v259 = vadd.f32 %v235, %v258
    %260 = vset.pattern.permute.xlu0 7
    %261 = vperm.xlu0 %260, %v86
    %v262 = vpop.permute.xlu0 %261
    %vm263 = vcmp.eq.s32.totalorder %v262, %v85
    %264 = vset.pattern.permute.xlu0 7
    %265 = vperm.xlu0 %264, %v93
    %v266 = vpop.permute.xlu0 %265
    %vm267 = vcmp.eq.s32.totalorder %v266, 1
    %vm268 = vmand %vm263, %vm267
    %v269 = vsel %vm268, 1, 0
    %v270 = vcvt.s32.f32 %v269
    %v271 = vadd.f32 %v247, %v270
    %272 = vset.pattern.permute.xlu0 7
    %273 = vperm.xlu0 %272, %v87
    %v274 = vpop.permute.xlu0 %273
    %vm275 = vcmp.eq.s32.totalorder %v274, %v85
    %276 = vset.pattern.permute.xlu0 7
    %277 = vperm.xlu0 %276, %v107
    %v278 = vpop.permute.xlu0 %277
    %vm279 = vcmp.eq.s32.totalorder %v278, 1
    %vm280 = vmand %vm275, %vm279
    %v281 = vsel %vm280, 1, 0
    %v282 = vcvt.s32.f32 %v281
    %v283 = vadd.f32 %v259, %v282
    %v284 = vpack.c.bf16 %v283, %v271
    %v285 = vld [vmem:[#allocation5] sm:$0xf]
    %v286 = vld [vmem:[#allocation5 + $0x4] sm:$0xf]
    %v287 = vld [vmem:[#allocation5 + $0x8] sm:$0xf]
    %v288 = vld [vmem:[#allocation5 + $0xc] sm:$0xf]
    %v289 = vld [vmem:[#allocation5 + $0x10] sm:$0xf]
    %v290 = vld [vmem:[#allocation5 + $0x14] sm:$0xf]
    %v291 = vld [vmem:[#allocation5 + $0x18] sm:$0xf]
    %v292 = vld [vmem:[#allocation5 + $0x1c] sm:$0xf]
    %v293 = vld [vmem:[#allocation5 + $0x20] sm:$0xf]
    %v294 = vld [vmem:[#allocation5 + $0x24] sm:$0xf]
    %v295 = vld [vmem:[#allocation5 + $0x28] sm:$0xf]
    %v296 = vld [vmem:[#allocation5 + $0x2c] sm:$0xf]
    %v297 = vld [vmem:[#allocation5 + $0x30] sm:$0xf]
    %v298 = vld [vmem:[#allocation5 + $0x34] sm:$0xf]
    %v299 = vld [vmem:[#allocation5 + $0x38] sm:$0xf]
    %v300 = vld [vmem:[#allocation5 + $0x3c] sm:$0xf]
    %v317 = vunpack.c.l.b16 %v285
    %v318 = vunpack.c.l.b16 %v286
    %v319 = vunpack.c.l.b16 %v287
    %v320 = vunpack.c.l.b16 %v288
    %v321 = vunpack.c.l.b16 %v289
    %v322 = vunpack.c.l.b16 %v290
    %v323 = vunpack.c.l.b16 %v291
    %v324 = vunpack.c.l.b16 %v292
    %v325 = vunpack.c.l.b16 %v293
    %v326 = vunpack.c.l.b16 %v294
    %v327 = vunpack.c.l.b16 %v295
    %v328 = vunpack.c.l.b16 %v296
    %v329 = vunpack.c.l.b16 %v297
    %v330 = vunpack.c.l.b16 %v298
    %v331 = vunpack.c.l.b16 %v299
    %v332 = vunpack.c.l.b16 %v300
    %v333 = vpack.c.b16 %v318, %v317
    %v334 = vpack.c.b16 %v320, %v319
    %v335 = vpack.c.b16 %v322, %v321
    %v336 = vpack.c.b16 %v324, %v323
    %v337 = vpack.c.b16 %v326, %v325
    %v338 = vpack.c.b16 %v328, %v327
    %v339 = vpack.c.b16 %v330, %v329
    %v340 = vpack.c.b16 %v332, %v331
    %349 = vmatprep.subr.bf16.mxu0 0
    %350 = vmatpush1.bf16.msra.mxu0 %v340
    %351 = vmatprep.subr.bf16.mxu0 0
    %352 = vmatpush1.bf16.msra.mxu0 %v339
    %353 = vmatprep.subr.bf16.mxu0 0
    %354 = vmatpush1.bf16.msra.mxu0 %v338
    %355 = vmatprep.subr.bf16.mxu0 0
    %356 = vmatpush1.bf16.msra.mxu0 %v337
    %357 = vmatprep.subr.bf16.mxu0 0
    %358 = vmatpush1.bf16.msra.mxu0 %v336
    %359 = vmatprep.subr.bf16.mxu0 0
    %360 = vmatpush1.bf16.msra.mxu0 %v335
    %361 = vmatprep.subr.bf16.mxu0 0
    %362 = vmatpush1.bf16.msra.mxu0 %v334
    %363 = vmatprep.subr.bf16.mxu0 0
    %364 = vmatpush1.bf16.msra.mxu0 %v333
    %365 = vmatprep.subr.bf16.mxu0 0
    %366 = vmatpush2.bf16.msra.mxu0 0
    %367 = vmatprep.subr.bf16.mxu0 0
    %368 = vmatpush2.bf16.msra.mxu0 0
    %369 = vmatprep.subr.bf16.mxu0 0
    %370 = vmatpush2.bf16.msra.mxu0 0
    %371 = vmatprep.subr.bf16.mxu0 0
    %372 = vmatpush2.bf16.msra.mxu0 0
    %373 = vmatprep.subr.bf16.mxu0 0
    %374 = vmatpush2.bf16.msra.mxu0 0
    %375 = vmatprep.subr.bf16.mxu0 0
    %376 = vmatpush2.bf16.msra.mxu0 0
    %377 = vmatprep.subr.bf16.mxu0 0
    %378 = vmatpush2.bf16.msra.mxu0 0
    %379 = vmatprep.subr.bf16.mxu0 0
    %380 = vmatpush2.bf16.msra.mxu0 0
    %381 = vmatprep.mubr.bf16.mxu0 0
    %382 = vmatmul.mubr.bf16.gmra.mxu0 %v284
    %v383 = vpop.f32.mrf.mxu0
    %v384 = vadd.f32 0.0, %v383
    %v385 = vpop.f32.mrf.mxu0
    %v386 = vpop.f32.mrf.mxu0
    %v387 = vadd.f32 0.0, %v386
    %v388 = vpop.f32.mrf.mxu0
    %389 = vdwg.mxu0
    %v390 = vcvt.s32.f32 %v93
    %vm391 = vcmask 64512
    %v392 = vsel %vm391, %v390, 0.0
    %393 = vadd.xlane.f32.xlu0 %v392
    %v394 = vpop.xlane.xlu0 %393
    %v395 = vcvt.s32.f32 %v107
    %v396 = vsel %vm391, %v395, 0.0
    %397 = vadd.xlane.f32.xlu0 %v396
    %v398 = vpop.xlane.xlu0 %397
    %v399 = vmax.f32 %v394, 1.0
    %v400 = vrcp.pop %v399
    %v401 = vmul.f32 %v384, %v400
    %v402 = vmax.f32 %v398, 1.0
    %v403 = vrcp.pop %v402
    %v404 = vmul.f32 %v387, %v403
    %v405 = vld [vmem:[%s5] sm:$0x1]
    %v407 = vlaneseq
    %v408 = vshrl.u32 %v407, 7
    %v409 = vsub.s32 0, %v408
    %v410 = vrot.slane %v405, %v409
    %v412 = vmul.f32 %v401, %v410
    %v413 = vld [vmem:[%s6] sm:$0x1]
    %v415 = vlaneseq
    %v416 = vshrl.u32 %v415, 7
    %v417 = vsub.s32 0, %v416
    %v418 = vrot.slane %v413, %v417
    %v420 = vmul.f32 %v404, %v418
    %v421 = vadd.f32 %v412, %v420
    %422 = vadd.xlane.f32.xlu0 %v421
    %v423 = vpop.xlane.xlu0 %422
    %v424 = vsub.f32 0.0, %v423
    %v425 = vmul.f32 %v424, 1.442695
    %v426 = vpow.pop %v425
    %v427 = vadd.f32 %v426, 1.0
    %v428 = vrcp.pop %v427
    %v429 = vmul.f32 1.0, %v428
    %v430 = vmul.f32 %v429, %v401
    %v431 = vsub.f32 1.0, %v429
    %v432 = vmul.f32 %v431, %v404
    %v433 = vadd.f32 %v430, %v432
    %v434 = vpack.c.bf16 %v433, %v433
    %v435 = vld [vmem:[#allocation8] sm:$0xf]
    %v436 = vld [vmem:[#allocation8 + $0x4] sm:$0xf]
    %v437 = vld [vmem:[#allocation8 + $0x8] sm:$0xf]
    %v438 = vld [vmem:[#allocation8 + $0xc] sm:$0xf]
    %v439 = vld [vmem:[#allocation8 + $0x10] sm:$0xf]
    %v440 = vld [vmem:[#allocation8 + $0x14] sm:$0xf]
    %v441 = vld [vmem:[#allocation8 + $0x18] sm:$0xf]
    %v442 = vld [vmem:[#allocation8 + $0x1c] sm:$0xf]
    %v443 = vld [vmem:[#allocation8 + $0x20] sm:$0xf]
    %v444 = vld [vmem:[#allocation8 + $0x24] sm:$0xf]
    %v445 = vld [vmem:[#allocation8 + $0x28] sm:$0xf]
    %v446 = vld [vmem:[#allocation8 + $0x2c] sm:$0xf]
    %v447 = vld [vmem:[#allocation8 + $0x30] sm:$0xf]
    %v448 = vld [vmem:[#allocation8 + $0x34] sm:$0xf]
    %v449 = vld [vmem:[#allocation8 + $0x38] sm:$0xf]
    %v450 = vld [vmem:[#allocation8 + $0x3c] sm:$0xf]
    %v467 = vunpack.c.l.b16 %v435
    %v468 = vunpack.c.l.b16 %v436
    %v469 = vunpack.c.l.b16 %v437
    %v470 = vunpack.c.l.b16 %v438
    %v471 = vunpack.c.l.b16 %v439
    %v472 = vunpack.c.l.b16 %v440
    %v473 = vunpack.c.l.b16 %v441
    %v474 = vunpack.c.l.b16 %v442
    %v475 = vunpack.c.l.b16 %v443
    %v476 = vunpack.c.l.b16 %v444
    %v477 = vunpack.c.l.b16 %v445
    %v478 = vunpack.c.l.b16 %v446
    %v479 = vunpack.c.l.b16 %v447
    %v480 = vunpack.c.l.b16 %v448
    %v481 = vunpack.c.l.b16 %v449
    %v482 = vunpack.c.l.b16 %v450
    %v483 = vpack.c.b16 %v468, %v467
    %v484 = vpack.c.b16 %v470, %v469
    %v485 = vpack.c.b16 %v472, %v471
    %v486 = vpack.c.b16 %v474, %v473
    %v487 = vpack.c.b16 %v476, %v475
    %v488 = vpack.c.b16 %v478, %v477
    %v489 = vpack.c.b16 %v480, %v479
    %v490 = vpack.c.b16 %v482, %v481
    %499 = vmatprep.subr.bf16.mxu0 0
    %500 = vmatpush1.bf16.msra.mxu0 %v490
    %501 = vmatprep.subr.bf16.mxu0 0
    %502 = vmatpush1.bf16.msra.mxu0 %v489
    %503 = vmatprep.subr.bf16.mxu0 0
    %504 = vmatpush1.bf16.msra.mxu0 %v488
    %505 = vmatprep.subr.bf16.mxu0 0
    %506 = vmatpush1.bf16.msra.mxu0 %v487
    %507 = vmatprep.subr.bf16.mxu0 0
    %508 = vmatpush1.bf16.msra.mxu0 %v486
    %509 = vmatprep.subr.bf16.mxu0 0
    %510 = vmatpush1.bf16.msra.mxu0 %v485
    %511 = vmatprep.subr.bf16.mxu0 0
    %512 = vmatpush1.bf16.msra.mxu0 %v484
    %513 = vmatprep.subr.bf16.mxu0 0
    %514 = vmatpush1.bf16.msra.mxu0 %v483
    %515 = vmatprep.subr.bf16.mxu0 0
    %516 = vmatpush2.bf16.msra.mxu0 0
    %517 = vmatprep.subr.bf16.mxu0 0
    %518 = vmatpush2.bf16.msra.mxu0 0
    %519 = vmatprep.subr.bf16.mxu0 0
    %520 = vmatpush2.bf16.msra.mxu0 0
    %521 = vmatprep.subr.bf16.mxu0 0
    %522 = vmatpush2.bf16.msra.mxu0 0
    %523 = vmatprep.subr.bf16.mxu0 0
    %524 = vmatpush2.bf16.msra.mxu0 0
    %525 = vmatprep.subr.bf16.mxu0 0
    %526 = vmatpush2.bf16.msra.mxu0 0
    %527 = vmatprep.subr.bf16.mxu0 0
    %528 = vmatpush2.bf16.msra.mxu0 0
    %529 = vmatprep.subr.bf16.mxu0 0
    %530 = vmatpush2.bf16.msra.mxu0 0
    %531 = vmatprep.mubr.bf16.mxu0 0
    %532 = vmatmul.mubr.bf16.gmra.mxu0 %v434
    %v533 = vpop.f32.mrf.mxu0
    %v534 = vadd.f32 0.0, %v533
    %v535 = vpop.f32.mrf.mxu0
    %v536 = vpop.f32.mrf.mxu0
    %v537 = vpop.f32.mrf.mxu0
    %538 = vdwg.mxu0
    %v539 = vpack.c.bf16 %v534, %v534
    %v540 = vld [vmem:[#allocation7] sm:$0xf]
    %v541 = vld [vmem:[#allocation7 + $0x4] sm:$0xf]
    %v542 = vld [vmem:[#allocation7 + $0x8] sm:$0xf]
    %v543 = vld [vmem:[#allocation7 + $0xc] sm:$0xf]
    %v544 = vld [vmem:[#allocation7 + $0x10] sm:$0xf]
    %v545 = vld [vmem:[#allocation7 + $0x14] sm:$0xf]
    %v546 = vld [vmem:[#allocation7 + $0x18] sm:$0xf]
    %v547 = vld [vmem:[#allocation7 + $0x1c] sm:$0xf]
    %v548 = vld [vmem:[#allocation7 + $0x20] sm:$0xf]
    %v549 = vld [vmem:[#allocation7 + $0x24] sm:$0xf]
    %v550 = vld [vmem:[#allocation7 + $0x28] sm:$0xf]
    %v551 = vld [vmem:[#allocation7 + $0x2c] sm:$0xf]
    %v552 = vld [vmem:[#allocation7 + $0x30] sm:$0xf]
    %v553 = vld [vmem:[#allocation7 + $0x34] sm:$0xf]
    %v554 = vld [vmem:[#allocation7 + $0x38] sm:$0xf]
    %v555 = vld [vmem:[#allocation7 + $0x3c] sm:$0xf]
    %v572 = vunpack.c.l.b16 %v540
    %v573 = vunpack.c.l.b16 %v541
    %v574 = vunpack.c.l.b16 %v542
    %v575 = vunpack.c.l.b16 %v543
    %v576 = vunpack.c.l.b16 %v544
    %v577 = vunpack.c.l.b16 %v545
    %v578 = vunpack.c.l.b16 %v546
    %v579 = vunpack.c.l.b16 %v547
    %v580 = vunpack.c.l.b16 %v548
    %v581 = vunpack.c.l.b16 %v549
    %v582 = vunpack.c.l.b16 %v550
    %v583 = vunpack.c.l.b16 %v551
    %v584 = vunpack.c.l.b16 %v552
    %v585 = vunpack.c.l.b16 %v553
    %v586 = vunpack.c.l.b16 %v554
    %v587 = vunpack.c.l.b16 %v555
    %v588 = vpack.c.b16 %v573, %v572
    %v589 = vpack.c.b16 %v575, %v574
    %v590 = vpack.c.b16 %v577, %v576
    %v591 = vpack.c.b16 %v579, %v578
    %v592 = vpack.c.b16 %v581, %v580
    %v593 = vpack.c.b16 %v583, %v582
    %v594 = vpack.c.b16 %v585, %v584
    %v595 = vpack.c.b16 %v587, %v586
    %604 = vmatprep.subr.bf16.mxu0 0
    %605 = vmatpush1.bf16.msra.mxu0 %v595
    %606 = vmatprep.subr.bf16.mxu0 0
    %607 = vmatpush1.bf16.msra.mxu0 %v594
    %608 = vmatprep.subr.bf16.mxu0 0
    %609 = vmatpush1.bf16.msra.mxu0 %v593
    %610 = vmatprep.subr.bf16.mxu0 0
    %611 = vmatpush1.bf16.msra.mxu0 %v592
    %612 = vmatprep.subr.bf16.mxu0 0
    %613 = vmatpush1.bf16.msra.mxu0 %v591
    %614 = vmatprep.subr.bf16.mxu0 0
    %615 = vmatpush1.bf16.msra.mxu0 %v590
    %616 = vmatprep.subr.bf16.mxu0 0
    %617 = vmatpush1.bf16.msra.mxu0 %v589
    %618 = vmatprep.subr.bf16.mxu0 0
    %619 = vmatpush1.bf16.msra.mxu0 %v588
    %620 = vmatprep.subr.bf16.mxu0 0
    %621 = vmatpush2.bf16.msra.mxu0 0
    %622 = vmatprep.subr.bf16.mxu0 0
    %623 = vmatpush2.bf16.msra.mxu0 0
    %624 = vmatprep.subr.bf16.mxu0 0
    %625 = vmatpush2.bf16.msra.mxu0 0
    %626 = vmatprep.subr.bf16.mxu0 0
    %627 = vmatpush2.bf16.msra.mxu0 0
    %628 = vmatprep.subr.bf16.mxu0 0
    %629 = vmatpush2.bf16.msra.mxu0 0
    %630 = vmatprep.subr.bf16.mxu0 0
    %631 = vmatpush2.bf16.msra.mxu0 0
    %632 = vmatprep.subr.bf16.mxu0 0
    %633 = vmatpush2.bf16.msra.mxu0 0
    %634 = vmatprep.subr.bf16.mxu0 0
    %635 = vmatpush2.bf16.msra.mxu0 0
    %636 = vmatprep.mubr.bf16.mxu0 0
    %637 = vmatmul.mubr.bf16.gmra.mxu0 %v539
    %v638 = vpop.f32.mrf.mxu0
    %v639 = vadd.f32 0.0, %v638
    %v640 = vpop.f32.mrf.mxu0
    %v641 = vpop.f32.mrf.mxu0
    %v642 = vpop.f32.mrf.mxu0
    %643 = vdwg.mxu0
    %v644 = vld [vmem:[%s2] sm:$0xff]
    %645 = vset.pattern.permute.xlu0 0
    %646 = vperm.xlu0 %645, %v644
    %v647 = vpop.permute.xlu0 %646
    %vm648 = vcmp.eq.s32.totalorder %v85, %v647
    %v649 = vsel %vm648, %v639, 0.0
    %650 = vadd.xlane.f32.xlu0 %v649
    %v651 = vpop.xlane.xlu0 %650
    %vm652 = vcmp.eq.s32.totalorder %v85, 0
    %v653 = vsel %vm652, %v651, 0.0
    %v654 = vadd.f32 %v653, 0.0
    %655 = vset.pattern.permute.xlu0 1
    %656 = vperm.xlu0 %655, %v644
    %v657 = vpop.permute.xlu0 %656
    %vm658 = vcmp.eq.s32.totalorder %v85, %v657
    %v659 = vsel %vm658, %v639, 0.0
    %660 = vadd.xlane.f32.xlu0 %v659
    %v661 = vpop.xlane.xlu0 %660
    %vm662 = vcmp.eq.s32.totalorder %v85, 1
    %v663 = vsel %vm662, %v661, 0.0
    %v664 = vadd.f32 %v654, %v663
    %665 = vset.pattern.permute.xlu0 2
    %666 = vperm.xlu0 %665, %v644
    %v667 = vpop.permute.xlu0 %666
    %vm668 = vcmp.eq.s32.totalorder %v85, %v667
    %v669 = vsel %vm668, %v639, 0.0
    %670 = vadd.xlane.f32.xlu0 %v669
    %v671 = vpop.xlane.xlu0 %670
    %vm672 = vcmp.eq.s32.totalorder %v85, 2
    %v673 = vsel %vm672, %v671, 0.0
    %v674 = vadd.f32 %v664, %v673
    %675 = vset.pattern.permute.xlu0 3
    %676 = vperm.xlu0 %675, %v644
    %v677 = vpop.permute.xlu0 %676
    %vm678 = vcmp.eq.s32.totalorder %v85, %v677
    %v679 = vsel %vm678, %v639, 0.0
    %680 = vadd.xlane.f32.xlu0 %v679
    %v681 = vpop.xlane.xlu0 %680
    %vm682 = vcmp.eq.s32.totalorder %v85, 3
    %v683 = vsel %vm682, %v681, 0.0
    %v684 = vadd.f32 %v674, %v683
    %685 = vst [vmem:[#allocation10] sm:$0xff] %v684
    // Predicated region
    $region50: #{tpu_custom_call.1} parent=1 // pred_check
      _
    $region51: #{tpu_custom_call.1} parent=1 // pred_check_branch
      %687 = sbr.rel (0) target = $region53
    $region52: #{tpu_custom_call.1} parent=1 // pred_region
      %s689 = ssub.s32 128, 128
      %690 = vsyncadd [#allocation4], %s689
      %s692 = sshll.u32 [#allocation10], 4
      %s693 = int_to_ptr.vmem [resolvable:$true] %s692
      %695 = dma.vmem_to_hbm [thread:$0]  %s693, 128, %s8, [#allocation4]
    $region53: #{tpu_custom_call.1} parent=1 // pred_fallthru
      _
    // Predicated region
    $region54: #{tpu_custom_call.1} parent=1 // pred_check
      _
    $region55: #{tpu_custom_call.1} parent=1 // pred_check_branch
      %697 = sbr.rel (0) target = $region57
    $region56: #{tpu_custom_call.1} parent=1 // pred_region
      %698 = dma.done [#allocation4], 128
    $region57: #{tpu_custom_call.1} parent=1 // pred_fallthru
      _
    %699 = vsyncpa [#allocation3], 1
    %700 = vsyncpa [#allocation6], 1
    %701 = vsyncpa [#allocation9], 1
    %702 = vsyncpa [#allocation4], 1

</llo_original>
